<compile_context>
chip_gen: v6e
topology: v6e:2x2x1
jax: 0.10.0
libtpu: 0.0.40
codegen_flags: <defaults>
</compile_context>

<pallas_src>
import math

import jax
import jax.numpy as jnp
import numpy as np
from jax.experimental import pallas as pl
from jax.experimental.pallas import tpu as pltpu


# ----------------------------------------------------------------------------
# Pallas kernel: fused 1x1-conv(+folded BN) + ReLU + global average pool
# ----------------------------------------------------------------------------
def _conv1x1_bn_relu_gap_kernel(x_ref, w_ref, b_ref, pool_ref, o_ref):
    # x_ref:    (Bb*P, Cin)   bf16  rows = Bb full batch elements, P = H*W
    # w_ref:    (Cin, Cout)   bf16  BN-folded, pre-transposed 1x1 conv weight
    # b_ref:    (1, Cout)     f32   BN-folded bias
    # pool_ref: (Bb, Bb*P)    f32   block-diagonal averaging matrix (1/P entries)
    # o_ref:    (Bb, Cout)    f32
    z = jnp.dot(x_ref[...], w_ref[...], preferred_element_type=jnp.float32)
    z = jnp.maximum(z + b_ref[...], 0.0)                       # bias + ReLU (f32, VPU)
    o_ref[...] = jnp.dot(pool_ref[...], z,                     # per-batch spatial mean
                         preferred_element_type=jnp.float32).astype(o_ref.dtype)


# ----------------------------------------------------------------------------
# Wrapper: SwinFeatureExtractor.feature_proj head on the last-stage feature map
# ----------------------------------------------------------------------------
def swin_feature_proj(feat_nhwc, w, b, gamma, beta, running_mean, running_var,
                      *, eps=1e-5, block_batch=None, matmul_dtype=jnp.bfloat16):
    """feat_nhwc: (B, H, W, C_in) last-stage Swin feature map (channels-last, as
    produced by timm features_only; the PyTorch permute to NCHW is a pure layout
    change and is absorbed here).  Returns (B, hidden) float32."""
    B, H, W, Cin = feat_nhwc.shape
    Cout = w.shape[0]
    P = H * W

    # ---- one-time XLA prep: fold eval-mode BN into the 1x1 conv, pre-transpose
    g = gamma * jax.lax.rsqrt(running_var + eps)                   # (Cout,)
    w_fold_t = (w * g[:, None]).T.astype(matmul_dtype)             # (Cin, Cout)
    b_fold = ((b - running_mean) * g + beta).reshape(1, Cout).astype(jnp.float32)

    # Batch elements per grid step: multiples of 8 sublanes when possible,
    # otherwise the full (small) batch so block dims equal array dims.
    if block_batch is None:
        block_batch = 8 if (B % 8 == 0) else B
    Bb = block_batch
    assert B % Bb == 0, "batch must be divisible by the batch block"

    x2d = feat_nhwc.reshape(B * P, Cin).astype(matmul_dtype)       # (B*P, Cin)

    # Block-diagonal averaging matrix: pool[j, j*P + p] = 1/P.
    pool = jnp.kron(jnp.eye(Bb, dtype=jnp.float32),
                    jnp.full((1, P), 1.0 / P, dtype=jnp.float32))  # (Bb, Bb*P)

    grid = (B // Bb,)
    return pl.pallas_call(
        _conv1x1_bn_relu_gap_kernel,
        out_shape=jax.ShapeDtypeStruct((B, Cout), jnp.float32),
        grid=grid,
        in_specs=[
            pl.BlockSpec((Bb * P, Cin), lambda i: (i, 0)),     # activation rows
            pl.BlockSpec((Cin, Cout), lambda i: (0, 0)),       # folded weight (constant)
            pl.BlockSpec((1, Cout), lambda i: (0, 0)),         # folded bias   (constant)
            pl.BlockSpec((Bb, Bb * P), lambda i: (0, 0)),      # pooling matrix (constant)
        ],
        out_specs=pl.BlockSpec((Bb, Cout), lambda i: (i, 0)),
        compiler_params=pltpu.CompilerParams(
            dimension_semantics=("parallel",)),
    )(x2d, w_fold_t, b_fold, pool)


# ----------------------------------------------------------------------------
# Pure-JAX reference (mirrors the PyTorch forward, eval-mode BN, all f32)
# ----------------------------------------------------------------------------
def swin_feature_proj_ref(feat_nhwc, w, b, gamma, beta, rm, rv, eps=1e-5):
    x = jnp.transpose(feat_nhwc, (0, 3, 1, 2))                     # permute(0,3,1,2)
    y = jnp.einsum("bchw,oc->bohw", x, w) + b[None, :, None, None]  # 1x1 conv
    inv = gamma / jnp.sqrt(rv + eps)
    y = (y - rm[None, :, None, None]) * inv[None, :, None, None] + beta[None, :, None, None]
    y = jnp.maximum(y, 0.0)                                        # ReLU
    return y.mean(axis=(2, 3))                                     # AdaptiveAvgPool2d((1,1)) + squeeze


if __name__ == "__main__":
    # Small shapes consistent with the module: last-stage Swin feature map for a
    # 224 input has 7x7 spatial; use C_in=96, hidden=128 (real: 1536 -> 768).
    B, H, W, Cin, Cout = 2, 7, 7, 96, 128

    key = jax.random.PRNGKey(0)
    k_feat, k_w, k_b, k_g, k_beta, k_rm, k_rv = jax.random.split(key, 7)

    feat = jax.random.normal(k_feat, (B, H, W, Cin), jnp.float32)        # backbone output stand-in
    w = jax.random.normal(k_w, (Cout, Cin), jnp.float32) / math.sqrt(Cin)  # Conv2d 1x1 weight
    b = jax.random.normal(k_b, (Cout,), jnp.float32) * 0.02               # Conv2d bias
    gamma = 0.5 + jax.random.uniform(k_g, (Cout,), jnp.float32)           # BN weight
    beta = jax.random.normal(k_beta, (Cout,), jnp.float32) * 0.02         # BN bias
    running_mean = jax.random.normal(k_rm, (Cout,), jnp.float32) * 0.1    # BN running mean
    running_var = 0.5 + jax.random.uniform(k_rv, (Cout,), jnp.float32)    # BN running var

    out = swin_feature_proj(feat, w, b, gamma, beta, running_mean, running_var)
    out = jax.block_until_ready(out)

    ref = swin_feature_proj_ref(feat, w, b, gamma, beta, running_mean, running_var)
    np.testing.assert_allclose(np.asarray(out), np.asarray(ref), rtol=2e-2, atol=2e-2)

    print("KERNEL_OK")
</pallas_src>

<mosaic_0001>
module attributes {stable_mosaic.version = 11 : i64} {
  func.func @_conv1x1_bn_relu_gap_kernel(%arg0: i32, %arg1: memref<98x96xbf16, #tpu.memory_space<vmem>>, %arg2: memref<96x128xbf16, #tpu.memory_space<vmem>>, %arg3: memref<1x128xf32, #tpu.memory_space<vmem>>, %arg4: memref<2x98xf32, #tpu.memory_space<vmem>>, %arg5: memref<2x128xf32, #tpu.memory_space<vmem>>) attributes {dimension_semantics = [#tpu.dimension_semantics<parallel>], iteration_bounds = array<i64: 1>, scalar_prefetch = 0 : i64, scratch_operands = 0 : i64, tpu.core_type = #tpu.core_type<tc>, window_params = [{transform_indices = @transform_0, window_bounds = array<i64: 98, 96>}, {pipeline_mode = #tpu.pipeline_mode<synchronous>, transform_indices = @transform_1, window_bounds = array<i64: 96, 128>}, {pipeline_mode = #tpu.pipeline_mode<synchronous>, transform_indices = @transform_2, window_bounds = array<i64: 1, 128>}, {pipeline_mode = #tpu.pipeline_mode<synchronous>, transform_indices = @transform_3, window_bounds = array<i64: 2, 98>}, {transform_indices = @transform_4, window_bounds = array<i64: 2, 128>}]} {
    %c0 = arith.constant 0 : index
    %c0_0 = arith.constant 0 : index
    %0 = vector.load %arg1[%c0, %c0_0] : memref<98x96xbf16, #tpu.memory_space<vmem>>, vector<98x96xbf16>
    %c0_1 = arith.constant 0 : index
    %c0_2 = arith.constant 0 : index
    %1 = vector.load %arg2[%c0_1, %c0_2] : memref<96x128xbf16, #tpu.memory_space<vmem>>, vector<96x128xbf16>
    %cst = arith.constant dense<0.000000e+00> : vector<98x128xf32>
    %2 = tpu.matmul %0, %1, %cst {dimension_numbers = #tpu.dot_dimension_numbers<[1], [0], [0], [1], [0, 0, 1, 1], [], []>} : vector<98x96xbf16>, vector<96x128xbf16>, vector<98x128xf32> -> vector<98x128xf32>
    %c0_3 = arith.constant 0 : index
    %c0_4 = arith.constant 0 : index
    %3 = vector.load %arg3[%c0_3, %c0_4] : memref<1x128xf32, #tpu.memory_space<vmem>>, vector<1x128xf32>
    %4 = vector.broadcast %3 : vector<1x128xf32> to vector<98x128xf32>
    %5 = arith.addf %2, %4 : vector<98x128xf32>
    %cst_5 = arith.constant 0.000000e+00 : f32
    %6 = vector.broadcast %cst_5 : f32 to vector<98x128xf32>
    %7 = arith.maximumf %5, %6 : vector<98x128xf32>
    %c0_6 = arith.constant 0 : index
    %c0_7 = arith.constant 0 : index
    %8 = vector.load %arg4[%c0_6, %c0_7] : memref<2x98xf32, #tpu.memory_space<vmem>>, vector<2x98xf32>
    %cst_8 = arith.constant dense<0.000000e+00> : vector<2x128xf32>
    %9 = tpu.matmul %8, %7, %cst_8 {dimension_numbers = #tpu.dot_dimension_numbers<[1], [0], [0], [1], [0, 0, 1, 1], [], []>} : vector<2x98xf32>, vector<98x128xf32>, vector<2x128xf32> -> vector<2x128xf32>
    %c0_9 = arith.constant 0 : index
    %c0_10 = arith.constant 0 : index
    %10 = vector.load %arg5[%c0_9, %c0_10] : memref<2x128xf32, #tpu.memory_space<vmem>>, vector<2x128xf32>
    tpu.vector_store %arg5[%c0_9, %c0_10], %9 {strides = array<i32>} : memref<2x128xf32, #tpu.memory_space<vmem>>, vector<2x128xf32>,
    return
  }
  func.func @transform_0(%arg0: i32) -> (i32, i32) {
    %c0_i32 = arith.constant 0 : i32
    %c0_i32_0 = arith.constant 0 : i32
    return %arg0, %c0_i32 : i32, i32
  }
  func.func @transform_1(%arg0: i32) -> (i32, i32) {
    %c0_i32 = arith.constant 0 : i32
    %c0_i32_0 = arith.constant 0 : i32
    %c0_i32_1 = arith.constant 0 : i32
    return %c0_i32, %c0_i32_0 : i32, i32
  }
  func.func @transform_2(%arg0: i32) -> (i32, i32) {
    %c0_i32 = arith.constant 0 : i32
    %c0_i32_0 = arith.constant 0 : i32
    %c0_i32_1 = arith.constant 0 : i32
    return %c0_i32, %c0_i32_0 : i32, i32
  }
  func.func @transform_3(%arg0: i32) -> (i32, i32) {
    %c0_i32 = arith.constant 0 : i32
    %c0_i32_0 = arith.constant 0 : i32
    %c0_i32_1 = arith.constant 0 : i32
    return %c0_i32, %c0_i32_0 : i32, i32
  }
  func.func @transform_4(%arg0: i32) -> (i32, i32) {
    %c0_i32 = arith.constant 0 : i32
    %c0_i32_0 = arith.constant 0 : i32
    return %arg0, %c0_i32 : i32, i32
  }
}

</mosaic_0001>

<llo_original>
// kernel: tpu_custom_call.1
$region0: #{tpu_custom_call.1}
  #allocation0 [shape = 'u32[]', space=smem, size = 0x4, offset = 0x4, fixed_abs, tag = 'smem constant byte address 0x4 - core index']
  #allocation1 [shape = 'u32[144,128]{1,0:T(1,128)}', space=vmem, size = 0x12000, scoped, tag = 'internal scratch']
  %s0 = inlined_call_operand.vmem [shape: bf16[98,96], index: 0, kind: input, shape index: {}]
  %s1 = inlined_call_operand.vmem [shape: bf16[96,128], index: 1, kind: input, shape index: {}]
  %s2 = inlined_call_operand.vmem [shape: f32[1,128], index: 2, kind: input, shape index: {}]
  %s3 = inlined_call_operand.vmem [shape: f32[2,98], index: 3, kind: input, shape index: {}]
  %s4 = inlined_call_operand.hbm [shape: f32[2,128], index: 4, kind: output, shape index: {}]
  %s5 = sld [smem:[#allocation0]]
  $region26: #{tpu_custom_call.1} parent=0
    _
  %s7 = ssub.s32 1, %s5
  %s8 = scalar_select 0, %s7, %s5
  $region1: #{tpu_custom_call.1} parent=0
    #allocation2 [shape = 'u8[1024]{0}', space=vmem, size = 0x400, scoped, tag = 'output window, operand 0, single buffered']
    #allocation3 [shape = 's32[1]{0}', space=sflag, size = 0x4, scoped, tag = 'scoped memory for tpu_custom_call.1']
    %9 = vsyncpa [#allocation3], 0
    // Predicated region
    $region2: #{tpu_custom_call.1} parent=1 // pred_check
      _
    $region3: #{tpu_custom_call.1} parent=1 // pred_check_branch
      %11 = sbr.rel (0) target = $region5
    $region4: #{tpu_custom_call.1} parent=1 // pred_region
      _
    $region5: #{tpu_custom_call.1} parent=1 // pred_fallthru
      _
    // Predicated region
    $region6: #{tpu_custom_call.1} parent=1 // pred_check
      _
    $region7: #{tpu_custom_call.1} parent=1 // pred_check_branch
      %13 = sbr.rel (0) target = $region9
    $region8: #{tpu_custom_call.1} parent=1 // pred_region
      _
    $region9: #{tpu_custom_call.1} parent=1 // pred_fallthru
      _
    // Predicated region
    $region10: #{tpu_custom_call.1} parent=1 // pred_check
      _
    $region11: #{tpu_custom_call.1} parent=1 // pred_check_branch
      %15 = sbr.rel (0) target = $region13
    $region12: #{tpu_custom_call.1} parent=1 // pred_region
      _
    $region13: #{tpu_custom_call.1} parent=1 // pred_fallthru
      _
    // Predicated region
    $region14: #{tpu_custom_call.1} parent=1 // pred_check
      _
    $region15: #{tpu_custom_call.1} parent=1 // pred_check_branch
      %17 = sbr.rel (0) target = $region17
    $region16: #{tpu_custom_call.1} parent=1 // pred_region
      _
    $region17: #{tpu_custom_call.1} parent=1 // pred_fallthru
      _
    %v19 = vld [vmem:[%s0] sm:$0xf]
    %v20 = vld [vmem:[%s0 + $0x4] sm:$0xf]
    %v21 = vld [vmem:[%s0 + $0x8] sm:$0xf]
    %v22 = vld [vmem:[%s0 + $0xc] sm:$0xf]
    %v23 = vld [vmem:[%s0 + $0x10] sm:$0xf]
    %v24 = vld [vmem:[%s0 + $0x14] sm:$0xf]
    %v25 = vld [vmem:[%s0 + $0x18] sm:$0xf]
    %v26 = vld [vmem:[%s0 + $0x1c] sm:$0xf]
    %v27 = vld [vmem:[%s0 + $0x20] sm:$0xf]
    %v28 = vld [vmem:[%s0 + $0x24] sm:$0xf]
    %v29 = vld [vmem:[%s0 + $0x28] sm:$0xf]
    %v30 = vld [vmem:[%s0 + $0x2c] sm:$0xf]
    %v31 = vld [vmem:[%s0 + $0x30] sm:$0x1]
    %v32 = vld [vmem:[%s1] sm:$0xf]
    %v33 = vld [vmem:[%s1 + $0x4] sm:$0xf]
    %v34 = vld [vmem:[%s1 + $0x8] sm:$0xf]
    %v35 = vld [vmem:[%s1 + $0xc] sm:$0xf]
    %v36 = vld [vmem:[%s1 + $0x10] sm:$0xf]
    %v37 = vld [vmem:[%s1 + $0x14] sm:$0xf]
    %v38 = vld [vmem:[%s1 + $0x18] sm:$0xf]
    %v39 = vld [vmem:[%s1 + $0x1c] sm:$0xf]
    %v40 = vld [vmem:[%s1 + $0x20] sm:$0xf]
    %v41 = vld [vmem:[%s1 + $0x24] sm:$0xf]
    %v42 = vld [vmem:[%s1 + $0x28] sm:$0xf]
    %v43 = vld [vmem:[%s1 + $0x2c] sm:$0xf]
    %v44 = vld [vmem:[%s2] sm:$0x1]
    %v46 = vlaneseq
    %v47 = vshrl.u32 %v46, 7
    %v48 = vsub.s32 0, %v47
    %v49 = vrot.slane %v44, %v48
    %v64 = vunpack.c.l.b16 %v19
    %v65 = vunpack.c.l.b16 %v20
    %v66 = vunpack.c.l.b16 %v21
    %v67 = vunpack.c.l.b16 %v22
    %v68 = vunpack.c.l.b16 %v23
    %v69 = vunpack.c.l.b16 %v24
    %v70 = vunpack.c.l.b16 %v25
    %v71 = vunpack.c.l.b16 %v26
    %v72 = vunpack.c.l.b16 %v27
    %v73 = vunpack.c.l.b16 %v28
    %v74 = vunpack.c.l.b16 %v29
    %v75 = vunpack.c.l.b16 %v30
    %v76 = vunpack.c.l.b16 %v31
    %v77 = vpack.c.b16 %v65, %v64
    %v78 = vpack.c.b16 %v67, %v66
    %v79 = vpack.c.b16 %v69, %v68
    %v80 = vpack.c.b16 %v71, %v70
    %v81 = vpack.c.b16 %v73, %v72
    %v82 = vpack.c.b16 %v75, %v74
    %v83 = vpack.c.b16 %v76, %v76
    %v96 = vunpack.c.l.b16 %v32
    %v97 = vunpack.c.l.b16 %v33
    %v98 = vunpack.c.l.b16 %v34
    %v99 = vunpack.c.l.b16 %v35
    %v100 = vunpack.c.l.b16 %v36
    %v101 = vunpack.c.l.b16 %v37
    %v102 = vunpack.c.l.b16 %v38
    %v103 = vunpack.c.l.b16 %v39
    %v104 = vunpack.c.l.b16 %v40
    %v105 = vunpack.c.l.b16 %v41
    %v106 = vunpack.c.l.b16 %v42
    %v107 = vunpack.c.l.b16 %v43
    %v108 = vpack.c.b16 %v97, %v96
    %v109 = vpack.c.b16 %v99, %v98
    %v110 = vpack.c.b16 %v101, %v100
    %v111 = vpack.c.b16 %v103, %v102
    %v112 = vpack.c.b16 %v105, %v104
    %v113 = vpack.c.b16 %v107, %v106
    %vm120 = vcmask 785408
    %v122 = vsel %vm120, %v77, 0
    %v125 = vsel %vm120, %v78, 0
    %v128 = vsel %vm120, %v79, 0
    %v131 = vsel %vm120, %v80, 0
    %v134 = vsel %vm120, %v81, 0
    %v137 = vsel %vm120, %v82, 0
    %v140 = vsel %vm120, %v83, 0
    %142 = vmatprep.subr.bf16.mxu0 0
    %143 = vmatpush1.bf16.msra.mxu0 0
    %144 = vmatprep.subr.bf16.mxu0 0
    %145 = vmatpush1.bf16.msra.mxu0 0
    %146 = vmatprep.subr.bf16.mxu0 0
    %147 = vmatpush1.bf16.msra.mxu0 %v113
    %148 = vmatprep.subr.bf16.mxu0 0
    %149 = vmatpush1.bf16.msra.mxu0 %v112
    %150 = vmatprep.subr.bf16.mxu0 0
    %151 = vmatpush1.bf16.msra.mxu0 %v111
    %152 = vmatprep.subr.bf16.mxu0 0
    %153 = vmatpush1.bf16.msra.mxu0 %v110
    %154 = vmatprep.subr.bf16.mxu0 0
    %155 = vmatpush1.bf16.msra.mxu0 %v109
    %156 = vmatprep.subr.bf16.mxu0 0
    %157 = vmatpush1.bf16.msra.mxu0 %v108
    %158 = vmatprep.subr.bf16.mxu0 0
    %159 = vmatpush2.bf16.msra.mxu0 0
    %160 = vmatprep.subr.bf16.mxu0 0
    %161 = vmatpush2.bf16.msra.mxu0 0
    %162 = vmatprep.subr.bf16.mxu0 0
    %163 = vmatpush2.bf16.msra.mxu0 0
    %164 = vmatprep.subr.bf16.mxu0 0
    %165 = vmatpush2.bf16.msra.mxu0 0
    %166 = vmatprep.subr.bf16.mxu0 0
    %167 = vmatpush2.bf16.msra.mxu0 0
    %168 = vmatprep.subr.bf16.mxu0 0
    %169 = vmatpush2.bf16.msra.mxu0 0
    %170 = vmatprep.subr.bf16.mxu0 0
    %171 = vmatpush2.bf16.msra.mxu0 0
    %172 = vmatprep.subr.bf16.mxu0 0
    %173 = vmatpush2.bf16.msra.mxu0 0
    %174 = vmatprep.mubr.bf16.mxu0 0
    %175 = vmatmul.mubr.bf16.gmra.mxu0 %v122
    %v176 = vpop.f32.mrf.mxu0
    %v177 = vadd.f32 %v49, %v176
    %v178 = vpop.f32.mrf.mxu0
    %v179 = vpop.f32.mrf.mxu0
    %v180 = vadd.f32 %v49, %v179
    %v181 = vpop.f32.mrf.mxu0
    %182 = vmatprep.mubr.bf16.mxu0 0
    %183 = vmatmul.mubr.bf16.gmra.mxu0 %v125
    %v184 = vpop.f32.mrf.mxu0
    %v185 = vadd.f32 %v49, %v184
    %v186 = vpop.f32.mrf.mxu0
    %v187 = vpop.f32.mrf.mxu0
    %v188 = vadd.f32 %v49, %v187
    %v189 = vpop.f32.mrf.mxu0
    %190 = vmatprep.mubr.bf16.mxu0 0
    %191 = vmatmul.mubr.bf16.gmra.mxu0 %v128
    %v192 = vpop.f32.mrf.mxu0
    %v193 = vadd.f32 %v49, %v192
    %v194 = vpop.f32.mrf.mxu0
    %v195 = vpop.f32.mrf.mxu0
    %v196 = vadd.f32 %v49, %v195
    %v197 = vpop.f32.mrf.mxu0
    %198 = vmatprep.mubr.bf16.mxu0 0
    %199 = vmatmul.mubr.bf16.gmra.mxu0 %v131
    %v200 = vpop.f32.mrf.mxu0
    %v201 = vadd.f32 %v49, %v200
    %v202 = vpop.f32.mrf.mxu0
    %v203 = vpop.f32.mrf.mxu0
    %v204 = vadd.f32 %v49, %v203
    %v205 = vpop.f32.mrf.mxu0
    %206 = vmatprep.mubr.bf16.mxu0 0
    %207 = vmatmul.mubr.bf16.gmra.mxu0 %v134
    %v208 = vpop.f32.mrf.mxu0
    %v209 = vadd.f32 %v49, %v208
    %v210 = vpop.f32.mrf.mxu0
    %v211 = vpop.f32.mrf.mxu0
    %v212 = vadd.f32 %v49, %v211
    %v213 = vpop.f32.mrf.mxu0
    %214 = vmatprep.mubr.bf16.mxu0 0
    %215 = vmatmul.mubr.bf16.gmra.mxu0 %v137
    %v216 = vpop.f32.mrf.mxu0
    %v217 = vadd.f32 %v49, %v216
    %v218 = vpop.f32.mrf.mxu0
    %v219 = vpop.f32.mrf.mxu0
    %v220 = vadd.f32 %v49, %v219
    %v221 = vpop.f32.mrf.mxu0
    %222 = vmatprep.mubr.bf16.mxu0 0
    %223 = vmatmul.mubr.bf16.gmra.mxu0 %v140
    %v224 = vpop.f32.mrf.mxu0
    %v225 = vadd.f32 %v49, %v224
    %v226 = vpop.f32.mrf.mxu0
    %v227 = vpop.f32.mrf.mxu0
    %v228 = vpop.f32.mrf.mxu0
    %229 = vdwg.mxu0
    %v230 = vmax.f32 %v177, 0.0
    %v231 = vmax.f32 %v180, 0.0
    %v232 = vmax.f32 %v185, 0.0
    %v233 = vmax.f32 %v188, 0.0
    %v234 = vmax.f32 %v193, 0.0
    %v235 = vmax.f32 %v196, 0.0
    %v236 = vmax.f32 %v201, 0.0
    %v237 = vmax.f32 %v204, 0.0
    %v238 = vmax.f32 %v209, 0.0
    %v239 = vmax.f32 %v212, 0.0
    %v240 = vmax.f32 %v217, 0.0
    %v241 = vmax.f32 %v220, 0.0
    %v242 = vmax.f32 %v225, 0.0
    %v243 = vld [vmem:[%s3] sm:$0x3]
    %vm244 = vcmask 801792
    %v246 = vsel %vm244, %v243, 0
    %vm248 = vcmask 1041408
    %v250 = vsel %vm248, %v242, 0
    %252 = vmatprep.subr.mxu0 0.0
    %253 = vmatpush1.msra.mxu0 0.0
    %254 = vmatprep.subr.mxu0 0.0
    %255 = vmatpush1.msra.mxu0 0.0
    %256 = vmatprep.subr.mxu0 0.0
    %257 = vmatpush1.msra.mxu0 0.0
    %258 = vmatprep.subr.mxu0 0.0
    %259 = vmatpush1.msra.mxu0 %v250
    %260 = vmatprep.subr.mxu0 0.0
    %261 = vmatpush1.msra.mxu0 %v241
    %262 = vmatprep.subr.mxu0 0.0
    %263 = vmatpush1.msra.mxu0 %v240
    %264 = vmatprep.subr.mxu0 0.0
    %265 = vmatpush1.msra.mxu0 %v239
    %266 = vmatprep.subr.mxu0 0.0
    %267 = vmatpush1.msra.mxu0 %v238
    %268 = vmatprep.subr.mxu0 0.0
    %269 = vmatpush1.msra.mxu0 %v237
    %270 = vmatprep.subr.mxu0 0.0
    %271 = vmatpush1.msra.mxu0 %v236
    %272 = vmatprep.subr.mxu0 0.0
    %273 = vmatpush1.msra.mxu0 %v235
    %274 = vmatprep.subr.mxu0 0.0
    %275 = vmatpush1.msra.mxu0 %v234
    %276 = vmatprep.subr.mxu0 0.0
    %277 = vmatpush1.msra.mxu0 %v233
    %278 = vmatprep.subr.mxu0 0.0
    %279 = vmatpush1.msra.mxu0 %v232
    %280 = vmatprep.subr.mxu0 0.0
    %281 = vmatpush1.msra.mxu0 %v231
    %282 = vmatprep.subr.mxu0 0.0
    %283 = vmatpush1.msra.mxu0 %v230
    %284 = vmatprep.subr.mxu0 0.0
    %285 = vmatpush2.msra.mxu0 0.0
    %286 = vmatprep.subr.mxu0 0.0
    %287 = vmatpush2.msra.mxu0 0.0
    %288 = vmatprep.subr.mxu0 0.0
    %289 = vmatpush2.msra.mxu0 0.0
    %290 = vmatprep.subr.mxu0 0.0
    %291 = vmatpush2.msra.mxu0 0.0
    %292 = vmatprep.subr.mxu0 0.0
    %293 = vmatpush2.msra.mxu0 0.0
    %294 = vmatprep.subr.mxu0 0.0
    %295 = vmatpush2.msra.mxu0 0.0
    %296 = vmatprep.subr.mxu0 0.0
    %297 = vmatpush2.msra.mxu0 0.0
    %298 = vmatprep.subr.mxu0 0.0
    %299 = vmatpush2.msra.mxu0 0.0
    %300 = vmatprep.subr.mxu0 0.0
    %301 = vmatpush2.msra.mxu0 0.0
    %302 = vmatprep.subr.mxu0 0.0
    %303 = vmatpush2.msra.mxu0 0.0
    %304 = vmatprep.subr.mxu0 0.0
    %305 = vmatpush2.msra.mxu0 0.0
    %306 = vmatprep.subr.mxu0 0.0
    %307 = vmatpush2.msra.mxu0 0.0
    %308 = vmatprep.subr.mxu0 0.0
    %309 = vmatpush2.msra.mxu0 0.0
    %310 = vmatprep.subr.mxu0 0.0
    %311 = vmatpush2.msra.mxu0 0.0
    %312 = vmatprep.subr.mxu0 0.0
    %313 = vmatpush2.msra.mxu0 0.0
    %314 = vmatprep.subr.mxu0 0.0
    %315 = vmatpush2.msra.mxu0 0.0
    %316 = vmatprep.mubr.f32.mxu0 0.0
    %317 = vmatmul.mubr.f32.gmra.mxu0 %v246
    %v318 = vpop.f32.mrf.mxu0
    %v319 = vadd.f32 0.0, %v318
    %v320 = vpop.f32.mrf.mxu0
    %321 = vdwg.mxu0
    %322 = vst [vmem:[#allocation2] sm:$0x3] %v319
    // Predicated region
    $region18: #{tpu_custom_call.1} parent=1 // pred_check
      _
    $region19: #{tpu_custom_call.1} parent=1 // pred_check_branch
      %324 = sbr.rel (0) target = $region21
    $region20: #{tpu_custom_call.1} parent=1 // pred_region
      %s326 = ssub.s32 32, 32
      %327 = vsyncadd [#allocation3], %s326
      %s329 = sshll.u32 [#allocation2], 4
      %s330 = int_to_ptr.vmem [resolvable:$true] %s329
      %332 = dma.vmem_to_hbm [thread:$0]  %s330, 32, %s4, [#allocation3]
    $region21: #{tpu_custom_call.1} parent=1 // pred_fallthru
      _
    // Predicated region
    $region22: #{tpu_custom_call.1} parent=1 // pred_check
      _
    $region23: #{tpu_custom_call.1} parent=1 // pred_check_branch
      %334 = sbr.rel (0) target = $region25
    $region24: #{tpu_custom_call.1} parent=1 // pred_region
      %335 = dma.done [#allocation3], 32
    $region25: #{tpu_custom_call.1} parent=1 // pred_fallthru
      _
    %336 = vsyncpa [#allocation3], 1

</llo_original>
